<compile_context>
chip_gen: v5e
topology: v5e:2x2
jax: 0.10.0
libtpu: 0.0.40
codegen_flags: <defaults>
</compile_context>

<pallas_src>
from functools import partial

import jax
import jax.numpy as jnp
from jax.experimental import pallas as pl
from jax.experimental.pallas import tpu as pltpu


def _round_up(n, m):
    return ((n + m - 1) // m) * m


def _discriminator_kernel(x_ref, w_ref, b_ref, o_ref, *, groups, approx):
    # x_ref: (tile_m, 128) VMEM, input dtype (f32 or bf16)
    # w_ref: (1, 128)      VMEM, same dtype as x (resident across the grid)
    # b_ref: (1,)          SMEM f32 scalar
    # o_ref: (groups, 128) VMEM f32, lane-dense (groups = tile_m // 128)
    w = w_ref[...]                                   # (1, 128)
    b = b_ref[0]
    for g in range(groups):                          # static unroll
        xg = x_ref[pl.ds(g * 128, 128), :]           # (128, 128), native dtype
        # VPU broadcast-multiply in the input dtype (no N=1 MXU matmul),
        # upcast to f32 for the reduction.
        prod = (xg * w).astype(jnp.float32)          # (128 rows, 128 feat)
        # Transpose so batch rows sit on lanes, then reduce features over
        # sublanes -> lane-dense (1, 128) logits row (XLU work, off crit path).
        logits = jnp.sum(prod.T, axis=0, keepdims=True) + b      # (1, 128)
        sig = pl.reciprocal(1.0 + jnp.exp(-logits), approx=approx)
        o_ref[pl.ds(g, 1), :] = sig.astype(o_ref.dtype)


def discriminator_forward(x, w, b, *, tile_m=4096, approx_sigmoid=True):
    """sigmoid(x @ w.T + b).

    x: (B, 128) features (f32 or already-bf16 in HBM -- the kernel never casts x);
    w: (1, 128) (torch nn.Linear.weight layout); b: (1,).  Returns (B, 1) float32.
    """
    B, D = x.shape
    assert D == 128 and w.shape == (1, D)
    b = jnp.asarray(b, jnp.float32).reshape(1)
    w = jnp.asarray(w).astype(x.dtype)      # tiny (1,128) cast; x is never cast

    # Tile must be a multiple of 128 (kernel emits lane-dense 128-row groups).
    tm = min(max(int(tile_m), 128), 16384)          # 16384 f32 = 8 MiB/buffer max
    tm = _round_up(tm, 128)
    tm = min(tm, _round_up(B, 128))
    grid_m = pl.cdiv(B, tm)                         # ragged tail handled by Pallas
    groups = tm // 128
    out_rows = grid_m * groups

    out = pl.pallas_call(
        partial(_discriminator_kernel, groups=groups, approx=approx_sigmoid),
        out_shape=jax.ShapeDtypeStruct((out_rows, 128), jnp.float32),
        grid_spec=pltpu.PrefetchScalarGridSpec(
            num_scalar_prefetch=0,
            grid=(grid_m,),
            in_specs=[
                pl.BlockSpec((tm, D), lambda i: (i, 0)),            # streamed batch tiles
                pl.BlockSpec((1, D), lambda i: (0, 0)),             # resident weight row
                pl.BlockSpec(memory_space=pltpu.MemorySpace.SMEM),  # scalar bias
            ],
            out_specs=pl.BlockSpec((groups, 128), lambda i: (i, 0)),  # lane-dense out
        ),
        compiler_params=pltpu.CompilerParams(
            dimension_semantics=("parallel",)),     # lets v7x shard batch over 2 TCs
    )(x, w, b)

    # Contiguous reshape + slice back to (B, 1): cheap, tiny (B floats).
    return out.reshape(-1)[:B].reshape(B, 1)


def init_params(key):
    # Mimic nn.Linear(128, 1) default init: U(-1/sqrt(128), 1/sqrt(128)).
    k_w, k_b = jax.random.split(key)
    bound = 1.0 / jnp.sqrt(128.0)
    w = jax.random.uniform(k_w, (1, 128), jnp.float32, -bound, bound)  # (out, in) torch layout
    b = jax.random.uniform(k_b, (1,), jnp.float32, -bound, bound)
    return w, b


if __name__ == "__main__":
    key = jax.random.PRNGKey(0)
    k_x, k_p, k_x2 = jax.random.split(key, 3)

    w, b = init_params(k_p)

    # 1) Small demo: batch=8 (single partial tile, default tile_m).
    B = 8
    x = jax.random.normal(k_x, (B, 128), jnp.float32)
    ref = jax.nn.sigmoid(x @ w.T + b)
    out = jax.block_until_ready(discriminator_forward(x, w, b))
    assert out.shape == (B, 1)
    assert jnp.allclose(out, ref, atol=2e-3), "f32 kernel mismatch vs reference"

    # 2) Multi-tile path with a ragged tail (no jnp.pad): B=300, tile_m=128 -> grid of 3.
    B2 = 300
    x2 = jax.random.normal(k_x2, (B2, 128), jnp.float32)
    ref2 = jax.nn.sigmoid(x2 @ w.T + b)
    out2 = jax.block_until_ready(discriminator_forward(x2, w, b, tile_m=128))
    assert out2.shape == (B2, 1)
    assert jnp.allclose(out2, ref2, atol=2e-3), "multi-tile kernel mismatch vs reference"

    # 3) Features that are ALREADY bf16 in HBM (e.g. master_controller emits bf16):
    #    the kernel streams them as-is (no wrapper cast of x).
    x2_bf16 = x2.astype(jnp.bfloat16)   # test-data construction only
    ref3 = jax.nn.sigmoid(x2_bf16.astype(jnp.float32) @ w.T + b)
    out3 = jax.block_until_ready(discriminator_forward(x2_bf16, w, b, tile_m=128))
    assert out3.shape == (B2, 1)
    assert jnp.allclose(out3, ref3, atol=2e-2), "bf16 kernel mismatch vs reference"

    print("KERNEL_OK")
</pallas_src>

<mosaic_0001>
module attributes {stable_mosaic.version = 11 : i64} {
  func.func @_discriminator_kernel(%arg0: i32, %arg1: memref<128x128xf32, #tpu.memory_space<vmem>>, %arg2: memref<1x128xf32, #tpu.memory_space<vmem>>, %arg3: memref<1xf32, #tpu.memory_space<smem>>, %arg4: memref<1x128xf32, #tpu.memory_space<vmem>>) attributes {dimension_semantics = [#tpu.dimension_semantics<parallel>], iteration_bounds = array<i64: 1>, scalar_prefetch = 0 : i64, scratch_operands = 0 : i64, tpu.core_type = #tpu.core_type<tc>, window_params = [{transform_indices = @transform_0, window_bounds = array<i64: 128, 128>}, {pipeline_mode = #tpu.pipeline_mode<synchronous>, transform_indices = @transform_1, window_bounds = array<i64: 1, 128>}, {transform_indices = @transform_2, window_bounds = array<i64: 1>}, {transform_indices = @transform_3, window_bounds = array<i64: 1, 128>}]} {
    %c0 = arith.constant 0 : index
    %c0_0 = arith.constant 0 : index
    %0 = vector.load %arg2[%c0, %c0_0] : memref<1x128xf32, #tpu.memory_space<vmem>>, vector<1x128xf32>
    %c0_1 = arith.constant 0 : index
    %1 = memref.load %arg3[%c0_1] : memref<1xf32, #tpu.memory_space<smem>>
    %c0_2 = arith.constant 0 : index
    %c0_3 = arith.constant 0 : index
    %2 = vector.load %arg1[%c0_2, %c0_3] : memref<128x128xf32, #tpu.memory_space<vmem>>, vector<128x128xf32>
    %3 = vector.broadcast %0 : vector<1x128xf32> to vector<128x128xf32>
    %4 = arith.mulf %2, %3 : vector<128x128xf32>
    %5 = tpu.transpose %4, [1, 0] : vector<128x128xf32> -> vector<128x128xf32>
    %cst = arith.constant dense<0.000000e+00> : vector<128xf32>
    %6 = vector.multi_reduction <add>, %5, %cst [0] : vector<128x128xf32> to vector<128xf32>
    %7 = vector.shape_cast %6 : vector<128xf32> to vector<1x128xf32>
    %8 = vector.broadcast %1 : f32 to vector<1x128xf32>
    %9 = arith.addf %7, %8 : vector<1x128xf32>
    %cst_4 = arith.constant 0.000000e+00 : f32
    %10 = vector.broadcast %cst_4 : f32 to vector<1x128xf32>
    %11 = arith.subf %10, %9 : vector<1x128xf32>
    %12 = math.exp %11 : vector<1x128xf32>
    %cst_5 = arith.constant 1.000000e+00 : f32
    %13 = vector.broadcast %cst_5 : f32 to vector<1x128xf32>
    %14 = arith.addf %13, %12 : vector<1x128xf32>
    %15 = tpu.reciprocal %14 {approx = true} : vector<1x128xf32> -> vector<1x128xf32>
    %c0_6 = arith.constant 0 : index
    %c0_7 = arith.constant 0 : index
    %16 = vector.load %arg4[%c0_6, %c0_7] : memref<1x128xf32, #tpu.memory_space<vmem>>, vector<1x128xf32>
    tpu.vector_store %arg4[%c0_6, %c0_7], %15 {strides = array<i32>} : memref<1x128xf32, #tpu.memory_space<vmem>>, vector<1x128xf32>,
    return
  }
  func.func @transform_0(%arg0: i32) -> (i32, i32) {
    %c0_i32 = arith.constant 0 : i32
    %c0_i32_0 = arith.constant 0 : i32
    return %arg0, %c0_i32 : i32, i32
  }
  func.func @transform_1(%arg0: i32) -> (i32, i32) {
    %c0_i32 = arith.constant 0 : i32
    %c0_i32_0 = arith.constant 0 : i32
    %c0_i32_1 = arith.constant 0 : i32
    return %c0_i32, %c0_i32_0 : i32, i32
  }
  func.func @transform_2(%arg0: i32) -> i32 {
    %c0_i32 = arith.constant 0 : i32
    %c0_i32_0 = arith.constant 0 : i32
    return %c0_i32 : i32
  }
  func.func @transform_3(%arg0: i32) -> (i32, i32) {
    %c0_i32 = arith.constant 0 : i32
    %c0_i32_0 = arith.constant 0 : i32
    return %arg0, %c0_i32 : i32, i32
  }
}

</mosaic_0001>

<llo_original>
// kernel: tpu_custom_call.1
$region0: #{tpu_custom_call.1}
  #allocation0 [shape = 'u32[]', space=smem, size = 0x4, offset = 0x4, fixed_abs, tag = 'smem constant byte address 0x4 - core index']
  #allocation1 [shape = 'u32[72,128]{1,0:T(1,128)}', space=vmem, size = 0x9000, scoped, tag = 'internal scratch']
  #allocation2 [shape = 'f32[1]{0:T(128)S(6)}', space=smem, size = 0x200, scoped, tag = 'scoped memory for tpu_custom_call.1']
  %s0 = inlined_call_operand.hbm [shape: f32[8,128], index: 0, kind: input, shape index: {}]
  %s1 = inlined_call_operand.vmem [shape: f32[1,128], index: 1, kind: input, shape index: {}]
  %s2 = inlined_call_operand.<no memory space> [shape: f32[1], index: 2, kind: input, shape index: {}]
  %s3 = inlined_call_operand.hbm [shape: f32[1,128], index: 3, kind: output, shape index: {}]
  %s4 = sld [smem:[#allocation0]]
  $region26: #{tpu_custom_call.1} parent=0
    _
  %s6 = ssub.s32 1, %s4
  %s7 = scalar_select 0, %s6, %s4
  %8 = sst [smem:[#allocation2]] %s2
  $region1: #{tpu_custom_call.1} parent=0
    #allocation3 [shape = 'u8[65536]{0}', space=vmem, size = 0x10000, scoped, tag = 'input window, operand 0, single buffered']
    #allocation4 [shape = 's32[1]{0}', space=sflag, size = 0x4, scoped, tag = 'scoped memory for tpu_custom_call.1']
    #allocation5 [shape = 's32[1]{0}', space=sflag, size = 0x4, scoped, tag = 'scoped memory for tpu_custom_call.1']
    #allocation6 [shape = 'u8[512]{0}', space=vmem, size = 0x400, scoped, tag = 'output window, operand 0, single buffered']
    %9 = vsyncpa [#allocation4], 0
    %10 = vsyncpa [#allocation5], 0
    // Predicated region
    $region2: #{tpu_custom_call.1} parent=1 // pred_check
      _
    $region3: #{tpu_custom_call.1} parent=1 // pred_check_branch
      %12 = sbr.rel (0) target = $region5
    $region4: #{tpu_custom_call.1} parent=1 // pred_region
      %14 = vsyncadd [#allocation4], 1920
      %s15 = sshll.u32 %s0, 4
      %s16 = int_to_ptr.hbm [resolvable:$true] %s15
      %s17 = sshll.u32 [#allocation3], 4
      %s18 = int_to_ptr.vmem [resolvable:$true] %s17
      %23 = dma.hbm_to_vmem [thread:$0]  %s16, 128, %s18, [#allocation4], 128, 128, 8
    $region5: #{tpu_custom_call.1} parent=1 // pred_fallthru
      _
    // Predicated region
    $region6: #{tpu_custom_call.1} parent=1 // pred_check
      _
    $region7: #{tpu_custom_call.1} parent=1 // pred_check_branch
      %25 = sbr.rel (0) target = $region9
    $region8: #{tpu_custom_call.1} parent=1 // pred_region
      _
    $region9: #{tpu_custom_call.1} parent=1 // pred_fallthru
      _
    // Predicated region
    $region10: #{tpu_custom_call.1} parent=1 // pred_check
      _
    $region11: #{tpu_custom_call.1} parent=1 // pred_check_branch
      %27 = sbr.rel (0) target = $region13
    $region12: #{tpu_custom_call.1} parent=1 // pred_region
      _
    $region13: #{tpu_custom_call.1} parent=1 // pred_fallthru
      _
    // Predicated region
    $region14: #{tpu_custom_call.1} parent=1 // pred_check
      _
    $region15: #{tpu_custom_call.1} parent=1 // pred_check_branch
      %29 = sbr.rel (0) target = $region17
    $region16: #{tpu_custom_call.1} parent=1 // pred_region
      %31 = dma.done [#allocation4], 2048
    $region17: #{tpu_custom_call.1} parent=1 // pred_fallthru
      _
    %v32 = vld [vmem:[%s1] sm:$0x1]
    %s33 = sld [smem:[#allocation2]]
    %v34 = vld [vmem:[#allocation3] sm:$0xff]
    %v35 = vld [vmem:[#allocation3 + $0x8] sm:$0xff]
    %v36 = vld [vmem:[#allocation3 + $0x10] sm:$0xff]
    %v37 = vld [vmem:[#allocation3 + $0x18] sm:$0xff]
    %v38 = vld [vmem:[#allocation3 + $0x20] sm:$0xff]
    %v39 = vld [vmem:[#allocation3 + $0x28] sm:$0xff]
    %v40 = vld [vmem:[#allocation3 + $0x30] sm:$0xff]
    %v41 = vld [vmem:[#allocation3 + $0x38] sm:$0xff]
    %v42 = vld [vmem:[#allocation3 + $0x40] sm:$0xff]
    %v43 = vld [vmem:[#allocation3 + $0x48] sm:$0xff]
    %v44 = vld [vmem:[#allocation3 + $0x50] sm:$0xff]
    %v45 = vld [vmem:[#allocation3 + $0x58] sm:$0xff]
    %v46 = vld [vmem:[#allocation3 + $0x60] sm:$0xff]
    %v47 = vld [vmem:[#allocation3 + $0x68] sm:$0xff]
    %v48 = vld [vmem:[#allocation3 + $0x70] sm:$0xff]
    %v49 = vld [vmem:[#allocation3 + $0x78] sm:$0xff]
    %v51 = vperm.slane %v32, 0
    %v53 = vmul.f32 %v34, %v51
    %v54 = vmul.f32 %v35, %v51
    %v55 = vmul.f32 %v36, %v51
    %v56 = vmul.f32 %v37, %v51
    %v57 = vmul.f32 %v38, %v51
    %v58 = vmul.f32 %v39, %v51
    %v59 = vmul.f32 %v40, %v51
    %v60 = vmul.f32 %v41, %v51
    %v61 = vmul.f32 %v42, %v51
    %v62 = vmul.f32 %v43, %v51
    %v63 = vmul.f32 %v44, %v51
    %v64 = vmul.f32 %v45, %v51
    %v65 = vmul.f32 %v46, %v51
    %v66 = vmul.f32 %v47, %v51
    %v67 = vmul.f32 %v48, %v51
    %v68 = vmul.f32 %v49, %v51
    %69 = vxpose.xlu0.b32.start [1/16] %v53, 128
    %70 = vxpose.xlu0.b32.cont [2/16] %v54, 128
    %71 = vxpose.xlu0.b32.cont [3/16] %v55, 128
    %72 = vxpose.xlu0.b32.cont [4/16] %v56, 128
    %73 = vxpose.xlu0.b32.cont [5/16] %v57, 128
    %74 = vxpose.xlu0.b32.cont [6/16] %v58, 128
    %75 = vxpose.xlu0.b32.cont [7/16] %v59, 128
    %76 = vxpose.xlu0.b32.cont [8/16] %v60, 128
    %77 = vxpose.xlu0.b32.cont [9/16] %v61, 128
    %78 = vxpose.xlu0.b32.cont [10/16] %v62, 128
    %79 = vxpose.xlu0.b32.cont [11/16] %v63, 128
    %80 = vxpose.xlu0.b32.cont [12/16] %v64, 128
    %81 = vxpose.xlu0.b32.cont [13/16] %v65, 128
    %82 = vxpose.xlu0.b32.cont [14/16] %v66, 128
    %83 = vxpose.xlu0.b32.cont [15/16] %v67, 128
    %84 = vxpose.xlu0.b32.end [16/16] %v68, 128
    %v85 = vpop.trf.xlu0
    %v86 = vpop.trf.xlu0
    %v87 = vpop.trf.xlu0
    %v88 = vpop.trf.xlu0
    %v89 = vpop.trf.xlu0
    %v90 = vpop.trf.xlu0
    %v91 = vpop.trf.xlu0
    %v92 = vpop.trf.xlu0
    %v93 = vpop.trf.xlu0
    %v94 = vpop.trf.xlu0
    %v95 = vpop.trf.xlu0
    %v96 = vpop.trf.xlu0
    %v97 = vpop.trf.xlu0
    %v98 = vpop.trf.xlu0
    %v99 = vpop.trf.xlu0
    %v100 = vpop.trf.xlu0
    %v101 = vadd.f32 %v85, %v86
    %v102 = vadd.f32 %v101, %v87
    %v103 = vadd.f32 %v102, %v88
    %v104 = vadd.f32 %v103, %v89
    %v105 = vadd.f32 %v104, %v90
    %v106 = vadd.f32 %v105, %v91
    %v107 = vadd.f32 %v106, %v92
    %v108 = vadd.f32 %v107, %v93
    %v109 = vadd.f32 %v108, %v94
    %v110 = vadd.f32 %v109, %v95
    %v111 = vadd.f32 %v110, %v96
    %v112 = vadd.f32 %v111, %v97
    %v113 = vadd.f32 %v112, %v98
    %v114 = vadd.f32 %v113, %v99
    %v115 = vadd.f32 %v114, %v100
    %v116 = vrot.slane %v115, 4
    %v117 = vadd.f32 %v115, %v116
    %v118 = vrot.slane %v117, 2
    %v119 = vadd.f32 %v117, %v118
    %v120 = vrot.slane %v119, 1
    %v121 = vadd.f32 %v119, %v120
    %v122 = vstv %s33
    %v123 = vadd.f32 %v121, %v122
    %v124 = vsub.f32 0.0, %v123
    %v125 = vmul.f32 %v124, 1.442695
    %v126 = vpow.pop %v125
    %v127 = vadd.f32 %v126, 1.0
    %v128 = vrcp.pop %v127
    %129 = vst [vmem:[#allocation6] sm:$0x1] %v128
    // Predicated region
    $region18: #{tpu_custom_call.1} parent=1 // pred_check
      _
    $region19: #{tpu_custom_call.1} parent=1 // pred_check_branch
      %131 = sbr.rel (0) target = $region21
    $region20: #{tpu_custom_call.1} parent=1 // pred_region
      %133 = vsyncadd [#allocation5], 0
      %s135 = sshll.u32 [#allocation6], 4
      %s136 = int_to_ptr.vmem [resolvable:$true] %s135
      %s137 = sshll.u32 %s3, 4
      %s138 = int_to_ptr.hbm [resolvable:$true] %s137
      %140 = dma.vmem_to_hbm [thread:$0]  %s136, 16, %s138, [#allocation5]
    $region21: #{tpu_custom_call.1} parent=1 // pred_fallthru
      _
    // Predicated region
    $region22: #{tpu_custom_call.1} parent=1 // pred_check
      _
    $region23: #{tpu_custom_call.1} parent=1 // pred_check_branch
      %142 = sbr.rel (0) target = $region25
    $region24: #{tpu_custom_call.1} parent=1 // pred_region
      %144 = dma.done [#allocation5], 16
    $region25: #{tpu_custom_call.1} parent=1 // pred_fallthru
      _
    %145 = vsyncpa [#allocation4], 1
    %146 = vsyncpa [#allocation5], 1

</llo_original>
